<compile_context>
chip_gen: v7x
topology: tpu7x:2x2x1
jax: 0.10.0
libtpu: 0.0.40
codegen_flags: <defaults>
</compile_context>

<pallas_src>
import functools

import jax
import jax.numpy as jnp
from jax.experimental import pallas as pl
from jax.experimental.pallas import tpu as pltpu


def _dice_partial_kernel(pred_ref, label_ref, tp_ref, den_ref, tp_acc, den_acc,
                         *, compute_dtype):
    # pred_ref:  (TB, C, TS) pred tile (native dtype)
    # label_ref: (TB, 1, TS) integer class indices (int8 / int32)
    # tp_ref:    (1, TB, C)  partial sum(p * onehot) for this (b, sp) block
    # den_ref:   (1, TB, C)  partial sum(p) + sum(onehot)  (= 2*tp + fp + fn)
    # tp_acc / den_acc: (TB, C) f32 running sums over the inner S tiles
    s_idx = pl.program_id(2)

    @pl.when(s_idx == 0)
    def _():
        tp_acc[...] = jnp.zeros_like(tp_acc)
        den_acc[...] = jnp.zeros_like(den_acc)

    p = pred_ref[...].astype(compute_dtype)            # (TB, C, TS)
    lab = label_ref[...].astype(jnp.int32)             # (TB, 1, TS)
    C = p.shape[1]

    # one-hot "scatter_" equivalent via broadcast compare; iota is only (1, C, 1)
    cls = jax.lax.broadcasted_iota(jnp.int32, (1, C, 1), 1)
    onehot = (lab == cls).astype(compute_dtype)        # (TB, C, TS)

    # Single product + single add per voxel; widen only at the accumulation.
    tp_acc[...] += jnp.sum((p * onehot).astype(jnp.float32), axis=-1)   # (TB, C)
    den_acc[...] += jnp.sum((p + onehot).astype(jnp.float32), axis=-1)  # (TB, C)

    @pl.when(s_idx == pl.num_programs(2) - 1)
    def _():
        tp_ref[...] = tp_acc[...][None, :, :]
        den_ref[...] = den_acc[...][None, :, :]


def _round_up(x, m):
    return ((x + m - 1) // m) * m


def _choose_tiles(B, C, Spad, pred_itemsize,
                  target_pred_bytes=4 << 20, vmem_budget=24 << 20):
    """Pick (tile_b, tile_s).  Budget the real VMEM footprint: x2 double
    buffering, pred sublane padding (C -> 8/16/32 rows), and the (tb,1,ts)
    label block which pads to ~32 B per voxel regardless of int8/int32."""
    c_pad = _round_up(C, max(1, 32 // pred_itemsize))

    def cost(tile_b, t):
        pred_blk = tile_b * c_pad * t * pred_itemsize
        lab_blk = tile_b * t * 32
        return pred_blk, 2 * (pred_blk + lab_blk)

    divisors = [t for t in range(128, Spad + 1, 128) if Spad % t == 0]
    fitting = [t for t in divisors
               if cost(1, t)[0] <= target_pred_bytes and cost(1, t)[1] <= vmem_budget]
    tile_s = max(fitting) if fitting else min(divisors)

    tile_b = 1
    if tile_s == Spad and B > 1:
        # Fold batch elements into one block only up to B//2 so the parallel
        # batch axis keeps >= 2 programs (both v7x TensorCores stay busy).
        for t in range(max(1, B // 2), 0, -1):
            if B % t == 0 and cost(t, Spad)[0] <= target_pred_bytes \
                    and cost(t, Spad)[1] <= vmem_budget:
                tile_b = t
                break
    return tile_b, tile_s


def _compute_dtype(pred_dtype):
    # bf16 VALU exists on v6e / v7x; v5e and older must compute in f32.
    if pred_dtype == jnp.bfloat16:
        try:
            kind = jax.devices()[0].device_kind.lower()
        except Exception:
            kind = ""
        if kind and all(v not in kind for v in ("v2", "v3", "v4", "v5")):
            return jnp.bfloat16
    return jnp.float32


def dice_loss(pred, label, smooth=1.0):
    """pred: (B, C, *spatial) float/bfloat; label: (B, *spatial) integer class indices."""
    B, C = pred.shape[0], pred.shape[1]
    S = 1
    for d in pred.shape[2:]:
        S *= d

    pred3 = pred.reshape(B, C, S)                      # keep native dtype (bf16 halves HBM)
    # Labels: always cast to the narrowest integer dtype (never stream i64/float).
    lab_dtype = jnp.int8 if C <= 127 else jnp.int32
    label3 = label.astype(lab_dtype).reshape(B, 1, S)

    # Pad S to a lane multiple; padded pred voxels are 0 and padded labels get
    # class C (out of range -> all-zero one-hot), so they contribute nothing.
    Spad = _round_up(S, 128)
    if Spad != S:
        pad = Spad - S
        pred3 = jnp.pad(pred3, ((0, 0), (0, 0), (0, pad)))
        label3 = jnp.pad(label3, ((0, 0), (0, 0), (0, pad)), constant_values=C)

    tile_b, tile_s = _choose_tiles(B, C, Spad, jnp.dtype(pred3.dtype).itemsize)
    n_b = B // tile_b
    n_s_total = Spad // tile_s
    # If there is only one batch program, split S into two independent parallel
    # halves so v7x's second TensorCore still gets work; partials recombine below.
    n_sp = 2 if (n_b == 1 and n_s_total >= 2 and n_s_total % 2 == 0) else 1
    n_s = n_s_total // n_sp

    kernel = functools.partial(_dice_partial_kernel,
                               compute_dtype=_compute_dtype(pred3.dtype))

    out_sd = jax.ShapeDtypeStruct((n_b * n_sp, tile_b, C), jnp.float32)
    tp_raw, den_raw = pl.pallas_call(
        kernel,
        out_shape=(out_sd, out_sd),
        grid_spec=pltpu.PrefetchScalarGridSpec(
            num_scalar_prefetch=0,
            grid=(n_b, n_sp, n_s),
            in_specs=[
                pl.BlockSpec((tile_b, C, tile_s),
                             lambda b, sp, s: (b, 0, sp * n_s + s)),
                pl.BlockSpec((tile_b, 1, tile_s),
                             lambda b, sp, s: (b, 0, sp * n_s + s)),
            ],
            out_specs=[
                pl.BlockSpec((1, tile_b, C), lambda b, sp, s: (b * n_sp + sp, 0, 0)),
                pl.BlockSpec((1, tile_b, C), lambda b, sp, s: (b * n_sp + sp, 0, 0)),
            ],
            scratch_shapes=[pltpu.VMEM((tile_b, C), jnp.float32)] * 2,
        ),
        compiler_params=pltpu.CompilerParams(
            # batch + spatial-split axes parallel (v7x dual-TC), inner S reduction
            dimension_semantics=("parallel", "parallel", "arbitrary"),
            vmem_limit_bytes=32 * 1024 * 1024,
        ),
    )(pred3, label3)

    # Combine spatial-parallel partials, then dice + mean in plain JAX.
    tp = tp_raw.reshape(n_b, n_sp, tile_b, C).sum(axis=1).reshape(B, C)
    den = den_raw.reshape(n_b, n_sp, tile_b, C).sum(axis=1).reshape(B, C)
    dice = (2.0 * tp + smooth) / (den + smooth)        # den = 2*tp + fp + fn
    # default config: batch_dice=False, do_bg=True -> mean over (B, C)
    return -jnp.mean(dice)


if __name__ == "__main__":
    key = jax.random.PRNGKey(0)
    kp, kl = jax.random.split(key)

    B, C, H, W = 2, 4, 16, 16
    pred = jax.random.uniform(kp, (B, C, H, W), dtype=jnp.float32)
    label = jax.random.randint(kl, (B, H, W), 0, C, dtype=jnp.int32)

    loss = jax.block_until_ready(dice_loss(pred, label))

    # plain-JAX reference (same math as the PyTorch module with defaults)
    onehot = (label[:, None, :, :] == jnp.arange(C)[None, :, None, None]).astype(
        jnp.float32
    )
    tp = jnp.sum(pred * onehot, axis=(2, 3))
    fp = jnp.sum(pred * (1.0 - onehot), axis=(2, 3))
    fn = jnp.sum((1.0 - pred) * onehot, axis=(2, 3))
    ref = -jnp.mean((2.0 * tp + 1.0) / (2.0 * tp + fp + fn + 1.0))

    assert jnp.allclose(loss, ref, atol=1e-5, rtol=1e-5), (float(loss), float(ref))
    print("KERNEL_OK")
</pallas_src>

<mosaic_0001>
module attributes {stable_mosaic.version = 11 : i64} {
  func.func @_dice_partial_kernel(%arg0: i32, %arg1: i32, %arg2: i32, %arg3: memref<1x4x256xf32, #tpu.memory_space<vmem>>, %arg4: memref<1x1x256xi8, #tpu.memory_space<vmem>>, %arg5: memref<1x1x4xf32, #tpu.memory_space<vmem>>, %arg6: memref<1x1x4xf32, #tpu.memory_space<vmem>>, %arg7: memref<1x4xf32, #tpu.memory_space<vmem>>, %arg8: memref<1x4xf32, #tpu.memory_space<vmem>>) attributes {dimension_semantics = [#tpu.dimension_semantics<parallel>, #tpu.dimension_semantics<parallel>, #tpu.dimension_semantics<arbitrary>], iteration_bounds = array<i64: 2, 1, 1>, scalar_prefetch = 0 : i64, scratch_operands = 2 : i64, tpu.core_type = #tpu.core_type<tc>, window_params = [{transform_indices = @transform_0, window_bounds = array<i64: 1, 4, 256>}, {transform_indices = @transform_1, window_bounds = array<i64: 1, 1, 256>}, {transform_indices = @transform_2, window_bounds = array<i64: 1, 1, 4>}, {transform_indices = @transform_3, window_bounds = array<i64: 1, 1, 4>}]} {
    %c0_i32 = arith.constant 0 : i32
    %0 = arith.cmpi eq, %arg2, %c0_i32 : i32
    %1 = arith.extui %0 : i1 to i32
    %c0_i32_0 = arith.constant 0 : i32
    %2 = arith.cmpi ne, %1, %c0_i32_0 : i32
    scf.if %2 {
      %cst_17 = arith.constant 0.000000e+00 : f32
      %25 = vector.broadcast %cst_17 : f32 to vector<1x4xf32>
      %c0_18 = arith.constant 0 : index
      %c0_19 = arith.constant 0 : index
      %26 = vector.load %arg7[%c0_18, %c0_19] : memref<1x4xf32, #tpu.memory_space<vmem>>, vector<1x4xf32>
      tpu.vector_store %arg7[%c0_18, %c0_19], %25 {strides = array<i32>} : memref<1x4xf32, #tpu.memory_space<vmem>>, vector<1x4xf32>,
      %cst_20 = arith.constant 0.000000e+00 : f32
      %27 = vector.broadcast %cst_20 : f32 to vector<1x4xf32>
      %c0_21 = arith.constant 0 : index
      %c0_22 = arith.constant 0 : index
      %28 = vector.load %arg8[%c0_21, %c0_22] : memref<1x4xf32, #tpu.memory_space<vmem>>, vector<1x4xf32>
      tpu.vector_store %arg8[%c0_21, %c0_22], %27 {strides = array<i32>} : memref<1x4xf32, #tpu.memory_space<vmem>>, vector<1x4xf32>,
    } else {
    }
    %c0 = arith.constant 0 : index
    %c0_1 = arith.constant 0 : index
    %c0_2 = arith.constant 0 : index
    %3 = vector.load %arg3[%c0, %c0_1, %c0_2] : memref<1x4x256xf32, #tpu.memory_space<vmem>>, vector<1x4x256xf32>
    %c0_3 = arith.constant 0 : index
    %c0_4 = arith.constant 0 : index
    %c0_5 = arith.constant 0 : index
    %4 = vector.load %arg4[%c0_3, %c0_4, %c0_5] : memref<1x1x256xi8, #tpu.memory_space<vmem>>, vector<1x1x256xi8>
    %5 = arith.extsi %4 : vector<1x1x256xi8> to vector<1x1x256xi32>
    %6 = tpu.iota {dimensions = array<i32: 1>} : vector<1x4x1xi32>
    %7 = vector.broadcast %5 : vector<1x1x256xi32> to vector<1x4x256xi32>
    %8 = vector.broadcast %6 : vector<1x4x1xi32> to vector<1x4x256xi32>
    %9 = arith.cmpi eq, %7, %8 : vector<1x4x256xi32>
    %10 = arith.extui %9 : vector<1x4x256xi1> to vector<1x4x256xi32>
    %11 = arith.sitofp %10 : vector<1x4x256xi32> to vector<1x4x256xf32>
    %c0_6 = arith.constant 0 : index
    %c0_7 = arith.constant 0 : index
    %12 = vector.load %arg7[%c0_6, %c0_7] : memref<1x4xf32, #tpu.memory_space<vmem>>, vector<1x4xf32>
    %13 = arith.mulf %3, %11 : vector<1x4x256xf32>
    %cst = arith.constant dense<0.000000e+00> : vector<1x4xf32>
    %14 = vector.multi_reduction <add>, %13, %cst [2] : vector<1x4x256xf32> to vector<1x4xf32>
    %15 = arith.addf %12, %14 : vector<1x4xf32>
    %c0_8 = arith.constant 0 : index
    %c0_9 = arith.constant 0 : index
    %16 = vector.load %arg7[%c0_8, %c0_9] : memref<1x4xf32, #tpu.memory_space<vmem>>, vector<1x4xf32>
    tpu.vector_store %arg7[%c0_8, %c0_9], %15 {strides = array<i32>} : memref<1x4xf32, #tpu.memory_space<vmem>>, vector<1x4xf32>,
    %c0_10 = arith.constant 0 : index
    %c0_11 = arith.constant 0 : index
    %17 = vector.load %arg8[%c0_10, %c0_11] : memref<1x4xf32, #tpu.memory_space<vmem>>, vector<1x4xf32>
    %18 = arith.addf %3, %11 : vector<1x4x256xf32>
    %cst_12 = arith.constant dense<0.000000e+00> : vector<1x4xf32>
    %19 = vector.multi_reduction <add>, %18, %cst_12 [2] : vector<1x4x256xf32> to vector<1x4xf32>
    %20 = arith.addf %17, %19 : vector<1x4xf32>
    %c0_13 = arith.constant 0 : index
    %c0_14 = arith.constant 0 : index
    %21 = vector.load %arg8[%c0_13, %c0_14] : memref<1x4xf32, #tpu.memory_space<vmem>>, vector<1x4xf32>
    tpu.vector_store %arg8[%c0_13, %c0_14], %20 {strides = array<i32>} : memref<1x4xf32, #tpu.memory_space<vmem>>, vector<1x4xf32>,
    %c0_i32_15 = arith.constant 0 : i32
    %22 = arith.cmpi eq, %arg2, %c0_i32_15 : i32
    %23 = arith.extui %22 : i1 to i32
    %c0_i32_16 = arith.constant 0 : i32
    %24 = arith.cmpi ne, %23, %c0_i32_16 : i32
    scf.if %24 {
      %c0_17 = arith.constant 0 : index
      %c0_18 = arith.constant 0 : index
      %25 = vector.load %arg7[%c0_17, %c0_18] : memref<1x4xf32, #tpu.memory_space<vmem>>, vector<1x4xf32>
      %26 = vector.shape_cast %25 : vector<1x4xf32> to vector<1x1x4xf32>
      %c0_19 = arith.constant 0 : index
      %c0_20 = arith.constant 0 : index
      %c0_21 = arith.constant 0 : index
      %27 = vector.load %arg5[%c0_19, %c0_20, %c0_21] : memref<1x1x4xf32, #tpu.memory_space<vmem>>, vector<1x1x4xf32>
      tpu.vector_store %arg5[%c0_19, %c0_20, %c0_21], %26 {strides = array<i32>} : memref<1x1x4xf32, #tpu.memory_space<vmem>>, vector<1x1x4xf32>,
      %c0_22 = arith.constant 0 : index
      %c0_23 = arith.constant 0 : index
      %28 = vector.load %arg8[%c0_22, %c0_23] : memref<1x4xf32, #tpu.memory_space<vmem>>, vector<1x4xf32>
      %29 = vector.shape_cast %28 : vector<1x4xf32> to vector<1x1x4xf32>
      %c0_24 = arith.constant 0 : index
      %c0_25 = arith.constant 0 : index
      %c0_26 = arith.constant 0 : index
      %30 = vector.load %arg6[%c0_24, %c0_25, %c0_26] : memref<1x1x4xf32, #tpu.memory_space<vmem>>, vector<1x1x4xf32>
      tpu.vector_store %arg6[%c0_24, %c0_25, %c0_26], %29 {strides = array<i32>} : memref<1x1x4xf32, #tpu.memory_space<vmem>>, vector<1x1x4xf32>,
    } else {
    }
    return
  }
  func.func @transform_0(%arg0: i32, %arg1: i32, %arg2: i32) -> (i32, i32, i32) {
    %c1_i32 = arith.constant 1 : i32
    %0 = arith.muli %arg1, %c1_i32 : i32
    %1 = arith.addi %0, %arg2 : i32
    %c0_i32 = arith.constant 0 : i32
    %c0_i32_0 = arith.constant 0 : i32
    return %arg0, %c0_i32, %1 : i32, i32, i32
  }
  func.func @transform_1(%arg0: i32, %arg1: i32, %arg2: i32) -> (i32, i32, i32) {
    %c1_i32 = arith.constant 1 : i32
    %0 = arith.muli %arg1, %c1_i32 : i32
    %1 = arith.addi %0, %arg2 : i32
    %c0_i32 = arith.constant 0 : i32
    %c0_i32_0 = arith.constant 0 : i32
    return %arg0, %c0_i32, %1 : i32, i32, i32
  }
  func.func @transform_2(%arg0: i32, %arg1: i32, %arg2: i32) -> (i32, i32, i32) {
    %c1_i32 = arith.constant 1 : i32
    %0 = arith.muli %arg0, %c1_i32 : i32
    %1 = arith.addi %0, %arg1 : i32
    %c0_i32 = arith.constant 0 : i32
    %c0_i32_0 = arith.constant 0 : i32
    %c0_i32_1 = arith.constant 0 : i32
    return %1, %c0_i32, %c0_i32_0 : i32, i32, i32
  }
  func.func @transform_3(%arg0: i32, %arg1: i32, %arg2: i32) -> (i32, i32, i32) {
    %c1_i32 = arith.constant 1 : i32
    %0 = arith.muli %arg0, %c1_i32 : i32
    %1 = arith.addi %0, %arg1 : i32
    %c0_i32 = arith.constant 0 : i32
    %c0_i32_0 = arith.constant 0 : i32
    %c0_i32_1 = arith.constant 0 : i32
    return %1, %c0_i32, %c0_i32_0 : i32, i32, i32
  }
}

</mosaic_0001>

<llo_original>
// kernel: tpu_custom_call.1
$region0: #{tpu_custom_call.1}
  #allocation0 [shape = 'u32[]', space=smem, size = 0x4, offset = 0x4, fixed_abs, tag = 'smem constant byte address 0x4 - core index']
  #allocation1 [shape = 'u32[144,128]{1,0:T(1,128)}', space=vmem, size = 0x12000, scoped, tag = 'internal scratch']
  #allocation2 [shape = 'f32[1,4]{1,0:T(1,128)}', space=vmem, size = 0x200, scoped, tag = 'scratch operand']
  #allocation3 [shape = 'f32[1,4]{1,0:T(1,128)}', space=vmem, size = 0x200, scoped, tag = 'scratch operand']
  %s0 = inlined_call_operand.hbm [shape: f32[2,4,256], index: 0, kind: input, shape index: {}]
  %s1 = inlined_call_operand.vmem [shape: s8[2,1,256], index: 1, kind: input, shape index: {}]
  %s2 = inlined_call_operand.hbm [shape: f32[2,1,4], index: 2, kind: output, shape index: {0}]
  %s3 = inlined_call_operand.hbm [shape: f32[2,1,4], index: 3, kind: output, shape index: {1}]
  %4 = xla_tuple %s2, %s3
  %s5 = sld [smem:[#allocation0]]
  $region61: #{tpu_custom_call.1} parent=0
    _
  %s7 = ssub.s32 1, %s5
  %s8 = scalar_select 0, %s7, %s5
  $region1: #{tpu_custom_call.1} parent=0
    #allocation4 [shape = 'u8[8192]{0}', space=vmem, size = 0x2000, scoped, tag = 'input window, operand 0']
    #allocation5 [shape = 's32[2]{0}', space=sflag, size = 0x8, scoped, tag = 'scoped memory for tpu_custom_call.1']
    #allocation6 [shape = 's32[2]{0}', space=sflag, size = 0x8, scoped, tag = 'scoped memory for tpu_custom_call.1']
    #allocation7 [shape = 'u8[1024]{0}', space=vmem, size = 0x400, scoped, tag = 'output window, operand 0']
    #allocation8 [shape = 'u8[1024]{0}', space=vmem, size = 0x400, scoped, tag = 'output window, operand 1']
    #allocation9 [shape = 's32[2]{0}', space=sflag, size = 0x8, scoped, tag = 'scoped memory for tpu_custom_call.1']
    %9 = vsyncpa [#allocation5], 0
    %s10 = scalar_lea.sflag [#allocation5], 1
    %11 = vsyncpa %s10, 0
    %12 = vsyncpa [#allocation6], 0
    %s13 = scalar_lea.sflag [#allocation6], 1
    %14 = vsyncpa %s13, 0
    %15 = vsyncpa [#allocation9], 0
    %s16 = scalar_lea.sflag [#allocation9], 1
    %17 = vsyncpa %s16, 0
    loop: start=0, step=1, limit=4
    $region2: #{tpu_custom_call.1} parent=1 // loop_pre_header
      _
    $region3: #{tpu_custom_call.1} parent=1 // loop_header
      %s19 = sphi 0, %s23
      %p20 = scmp.ge.s32.totalorder %s19, 4
      %s26 = sphi 0, %s45
      %s27 = sphi 0, %s41
      %s28 = sphi 0, %s37
      %s29 = sphi 0, %s26
      %s30 = sphi 0, %s27
      %s31 = sphi 0, %s28
      %s32 = sphi 0, %s29
      %s33 = sphi 0, %s30
      %s34 = sphi 0, %s31
      %s52 = sphi 0, %s54
      %s55 = sphi 0, %s52
      %s56 = sphi 0, %s55
      %s72 = sphi 0, %s56
      %s82 = sphi 0, %s84
      %s85 = sphi 0, %s82
      %s86 = sphi 0, %s85
      %s102 = sphi 0, %s86
      %s110 = sphi 0, %s112
      %s113 = sphi 0, %s110
      %s114 = sphi 0, %s113
      %s130 = sphi 0, %s114
      %s138 = sphi 0, %s140
      %s141 = sphi 0, %s138
      %s142 = sphi 0, %s141
      %s158 = sphi 0, %s142
    $region4: #{tpu_custom_call.1} parent=1 // loop_header_branch
      %22 = sbr.rel (%p20) target = $region8
    $region5: #{tpu_custom_call.1} parent=1 // loop_body
      %s24 = ssub.s32 %s19, 1
      %s25 = ssub.s32 %s19, 2
      %s35 = sadd.s32 1, %s28
      %p36 = scmp.ge.s32.totalorder %s35, 1
      %s37 = scalar_select %p36, 0, %s35
      %s38 = sadd.s32 1, %s27
      %s39 = scalar_select %p36, %s38, %s27
      %p40 = scmp.ge.s32.totalorder %s39, 1
      %s41 = scalar_select %p40, 0, %s39
      %s42 = sadd.s32 1, %s26
      %s43 = scalar_select %p40, %s42, %s26
      %p44 = scmp.ge.s32.totalorder %s43, 2
      %s45 = scalar_select %p44, 0, %s43
      %s46 = sadd.s32 %s27, %s28
      %s47 = sadd.s32 %s41, %s37
      %s48 = ssub.s32 %s26, %s45
      %s49 = ssub.s32 %s46, %s47
      %s50 = sor.u32 %s48, %s49
      %p51 = scmp.eq.s32.totalorder %s50, 0
      %s53 = sadd.s32 %s52, 1
      %s54 = scalar_select %p51, %s52, %s53
      %p57 = pneg %p51
      %p58 = scmp.eq.s32.totalorder %s19, 1
      %p59 = por %p57, %p58
      %p60 = scmp.ne.s32.totalorder %s52, %s55
      %p61 = scmp.eq.s32.totalorder %s19, 0
      %p62 = por %p60, %p61
      %p63 = scmp.ne.s32.totalorder %s52, %s55
      %p64 = scmp.eq.s32.totalorder %s24, 1
      %p65 = por %p63, %p64
      %p66 = scmp.ne.s32.totalorder %s55, %s56
      %p67 = scmp.eq.s32.totalorder %s24, 0
      %p68 = por %p66, %p67
      %p69 = scmp.ne.s32.totalorder %s55, %s56
      %p70 = scmp.eq.s32.totalorder %s25, 1
      %p71 = por %p69, %p70
      %p73 = scmp.ne.s32.totalorder %s56, %s72
      %p74 = scmp.eq.s32.totalorder %s25, 0
      %p75 = por %p73, %p74
      %s76 = sadd.s32 %s27, %s28
      %s77 = sadd.s32 %s41, %s37
      %s78 = ssub.s32 %s26, %s45
      %s79 = ssub.s32 %s76, %s77
      %s80 = sor.u32 %s78, %s79
      %p81 = scmp.eq.s32.totalorder %s80, 0
      %s83 = sadd.s32 %s82, 1
      %s84 = scalar_select %p81, %s82, %s83
      %p87 = pneg %p81
      %p88 = scmp.eq.s32.totalorder %s19, 1
      %p89 = por %p87, %p88
      %p90 = scmp.ne.s32.totalorder %s82, %s85
      %p91 = scmp.eq.s32.totalorder %s19, 0
      %p92 = por %p90, %p91
      %p93 = scmp.ne.s32.totalorder %s82, %s85
      %p94 = scmp.eq.s32.totalorder %s24, 1
      %p95 = por %p93, %p94
      %p96 = scmp.ne.s32.totalorder %s85, %s86
      %p97 = scmp.eq.s32.totalorder %s24, 0
      %p98 = por %p96, %p97
      %p99 = scmp.ne.s32.totalorder %s85, %s86
      %p100 = scmp.eq.s32.totalorder %s25, 1
      %p101 = por %p99, %p100
      %p103 = scmp.ne.s32.totalorder %s86, %s102
      %p104 = scmp.eq.s32.totalorder %s25, 0
      %p105 = por %p103, %p104
      %s106 = sadd.s32 %s26, %s27
      %s107 = sadd.s32 %s45, %s41
      %s108 = ssub.s32 %s106, %s107
      %p109 = scmp.eq.s32.totalorder %s108, 0
      %s111 = sadd.s32 %s110, 1
      %s112 = scalar_select %p109, %s110, %s111
      %p115 = pneg %p109
      %p116 = scmp.eq.s32.totalorder %s19, 1
      %p117 = por %p115, %p116
      %p118 = scmp.ne.s32.totalorder %s110, %s113
      %p119 = scmp.eq.s32.totalorder %s19, 0
      %p120 = por %p118, %p119
      %p121 = scmp.ne.s32.totalorder %s110, %s113
      %p122 = scmp.eq.s32.totalorder %s24, 1
      %p123 = por %p121, %p122
      %p124 = scmp.ne.s32.totalorder %s113, %s114
      %p125 = scmp.eq.s32.totalorder %s24, 0
      %p126 = por %p124, %p125
      %p127 = scmp.ne.s32.totalorder %s113, %s114
      %p128 = scmp.eq.s32.totalorder %s25, 1
      %p129 = por %p127, %p128
      %p131 = scmp.ne.s32.totalorder %s114, %s130
      %p132 = scmp.eq.s32.totalorder %s25, 0
      %p133 = por %p131, %p132
      %s134 = sadd.s32 %s26, %s27
      %s135 = sadd.s32 %s45, %s41
      %s136 = ssub.s32 %s134, %s135
      %p137 = scmp.eq.s32.totalorder %s136, 0
      %s139 = sadd.s32 %s138, 1
      %s140 = scalar_select %p137, %s138, %s139
      %p143 = pneg %p137
      %p144 = scmp.eq.s32.totalorder %s19, 1
      %p145 = por %p143, %p144
      %p146 = scmp.ne.s32.totalorder %s138, %s141
      %p147 = scmp.eq.s32.totalorder %s19, 0
      %p148 = por %p146, %p147
      %p149 = scmp.ne.s32.totalorder %s138, %s141
      %p150 = scmp.eq.s32.totalorder %s24, 1
      %p151 = por %p149, %p150
      %p152 = scmp.ne.s32.totalorder %s141, %s142
      %p153 = scmp.eq.s32.totalorder %s24, 0
      %p154 = por %p152, %p153
      %p155 = scmp.ne.s32.totalorder %s141, %s142
      %p156 = scmp.eq.s32.totalorder %s25, 1
      %p157 = por %p155, %p156
      %p159 = scmp.ne.s32.totalorder %s142, %s158
      %p160 = scmp.eq.s32.totalorder %s25, 0
      %p161 = por %p159, %p160
      %p162 = scmp.le.s32.totalorder 1, %s19
      %p163 = scmp.lt.s32.totalorder %s19, 3
      %p164 = pnand %p162, %p163
      %p165 = pneg %p164
      // Predicated region
      $region9: #{tpu_custom_call.1} parent=5 // pred_check
        _
      $region10: #{tpu_custom_call.1} parent=5 // pred_check_branch
        %167 = sbr.rel (%p164) target = $region12
      $region11: #{tpu_custom_call.1} parent=5 // pred_region
        %s168 = ssub.s32 %s19, 1
      $region12: #{tpu_custom_call.1} parent=5 // pred_fallthru
        _
      %p169 = scmp.lt.s32.totalorder %s19, 2
      // Predicated region
      $region13: #{tpu_custom_call.1} parent=5 // pred_check
        %p170 = pneg %p169
      $region14: #{tpu_custom_call.1} parent=5 // pred_check_branch
        %172 = sbr.rel (%p170) target = $region16
      $region15: #{tpu_custom_call.1} parent=5 // pred_region
        // Predicated region
        $region17: #{tpu_custom_call.1} parent=15 // pred_check
          %p173 = pneg %p62
        $region18: #{tpu_custom_call.1} parent=15 // pred_check_branch
          %175 = sbr.rel (%p173) target = $region20
        $region19: #{tpu_custom_call.1} parent=15 // pred_region
          %s176 = sand.u32 %s52, 1
          %s177 = scalar_lea.sflag [#allocation5], %s176
          %s178 = sand.u32 %s52, 1
          %s179 = smul.addr %s178, 8
          %s180 = scalar_lea.vmem [#allocation4], %s179
          %s181 = sadd.s32 %s27, %s28
          %s182 = smul.u32 2, %s181
          %s184 = ssub.s32 128, 128
          %185 = vsyncadd %s177, %s184
          %s186 = smul.addr %s26, 2
          %s187 = sadd.s32 %s182, %s186
          %s188 = smul.addr %s187, 64
          %s189 = scalar_lea.hbm %s0, %s188
          %s191 = sshll.u32 %s180, 4
          %s192 = int_to_ptr.vmem [resolvable:$true] %s191
          %194 = dma.hbm_to_vmem [thread:$0]  %s189, 128, %s192, %s177
        $region20: #{tpu_custom_call.1} parent=15 // pred_fallthru
          _
        // Predicated region
        $region21: #{tpu_custom_call.1} parent=15 // pred_check
          %p195 = pneg %p92
        $region22: #{tpu_custom_call.1} parent=15 // pred_check_branch
          %197 = sbr.rel (%p195) target = $region24
        $region23: #{tpu_custom_call.1} parent=15 // pred_region
          %s198 = sadd.s32 %s27, %s28
          %s199 = smul.u32 2, %s198
          %p200 = scmp.lt.s32.totalorder %s26, 1
          %s201 = scalar_select %p200, %s26, 1
          %p202 = scmp.lt.s32.totalorder %s199, 1
          %s203 = scalar_select %p202, %s199, 1
          %s204 = smul.addr %s201, 2
          %s205 = sadd.s32 %s203, %s204
          %s206 = scalar_lea.vmem %s1, %s205
          %s207 = sadd.s32 %s27, %s28
          %s208 = smul.u32 2, %s207
        $region24: #{tpu_custom_call.1} parent=15 // pred_fallthru
          _
      $region16: #{tpu_custom_call.1} parent=5 // pred_fallthru
        _
      %p209 = scmp.le.s32.totalorder 1, %s19
      %p210 = scmp.lt.s32.totalorder %s19, 3
      %p211 = pnand %p209, %p210
      %p212 = pneg %p211
      // Predicated region
      $region25: #{tpu_custom_call.1} parent=5 // pred_check
        _
      $region26: #{tpu_custom_call.1} parent=5 // pred_check_branch
        %214 = sbr.rel (%p211) target = $region28
      $region27: #{tpu_custom_call.1} parent=5 // pred_region
        %s215 = ssub.s32 %s19, 1
        %s216 = sand.u32 %s55, 1
        %s217 = scalar_lea.sflag [#allocation5], %s216
        %s218 = sand.u32 %s55, 1
        %s219 = smul.addr %s218, 8
        %s220 = scalar_lea.vmem [#allocation4], %s219
        // Predicated region
        $region29: #{tpu_custom_call.1} parent=27 // pred_check
          %p221 = pneg %p68
        $region30: #{tpu_custom_call.1} parent=27 // pred_check_branch
          %223 = sbr.rel (%p221) target = $region32
        $region31: #{tpu_custom_call.1} parent=27 // pred_region
          %224 = dma.done %s217, 128
        $region32: #{tpu_custom_call.1} parent=27 // pred_fallthru
          _
        %s225 = sand.u32 %s55, 1
        %s226 = scalar_lea.sflag [#allocation5], %s225
        %s227 = sand.u32 %s55, 1
        %s228 = smul.addr %s227, 8
        %s229 = scalar_lea.vmem [#allocation4], %s228
        %p230 = pneg %p68
        %p231 = pneg %p65
        %s232 = sadd.s32 %s30, %s31
        %s233 = smul.u32 2, %s232
        %p234 = scmp.lt.s32.totalorder %s29, 1
        %s235 = scalar_select %p234, %s29, 1
        %p236 = scmp.lt.s32.totalorder %s233, 1
        %s237 = scalar_select %p236, %s233, 1
        %s238 = smul.addr %s235, 2
        %s239 = sadd.s32 %s237, %s238
        %s240 = scalar_lea.vmem %s1, %s239
        %p241 = pneg %p98
        %p242 = pneg %p95
        %p243 = pneg %p126
        %p244 = pneg %p123
        %s245 = sand.u32 %s113, 1
        %s246 = scalar_lea.sflag [#allocation6], %s245
        %s247 = sand.u32 %s113, 1
        %s248 = scalar_lea.vmem [#allocation7], %s247
        %p249 = pneg %p154
        %p250 = pneg %p151
        %s251 = sand.u32 %s141, 1
        %s252 = scalar_lea.sflag [#allocation9], %s251
        %s253 = sand.u32 %s141, 1
        %s254 = scalar_lea.vmem [#allocation8], %s253
        %s255 = sadd.s32 %s30, %s31
        %s256 = smul.u32 2, %s255
        %s257 = sadd.s32 %s30, %s31
        %s258 = smul.u32 2, %s257
        %p259 = scmp.lt.s32.totalorder %s29, 1
        %s260 = scalar_select %p259, %s29, 1
        %p261 = scmp.lt.s32.totalorder %s258, 1
        %s262 = scalar_select %p261, %s258, 1
        %s263 = smul.addr %s260, 2
        %s264 = sadd.s32 %s262, %s263
        %s265 = scalar_lea.vmem %s1, %s264
        %s266 = sadd.s32 %s30, %s31
        %s267 = smul.u32 2, %s266
        %s268 = sadd.s32 %s29, %s30
        %s269 = sadd.s32 %s29, %s30
        %p270 = scmp.eq.s32.totalorder %s31, 0
        // Predicated region
        $region33: #{tpu_custom_call.1} parent=27 // pred_check
          %p271 = pneg %p270
        $region34: #{tpu_custom_call.1} parent=27 // pred_check_branch
          %273 = sbr.rel (%p271) target = $region36
        $region35: #{tpu_custom_call.1} parent=27 // pred_region
          %vm274 = vcmask 24576
          %275 = vst.msk [vmem:[#allocation2] sm:$0x1] %vm274, 0.0
          %276 = vst.msk [vmem:[#allocation3] sm:$0x1] %vm274, 0.0
        $region36: #{tpu_custom_call.1} parent=27 // pred_fallthru
          _
        %v277 = vld [vmem:[%s220] sm:$0xff]
        %v278 = vld [vmem:[%s265] sm:$0x3]
        %v279 = vunpack.c.0.s8 %v278
        %v280 = vlaneseq
        %v281 = vshrl.u32 %v280, 7
        %v282 = vlaneseq
        %v283 = vshrl.u32 %v282, 7
        %v284 = vsub.s32 0, %v283
        %v285 = vrot.slane %v279, %v284
        %v286 = vlaneseq
        %v287 = vshrl.u32 %v286, 7
        %v288 = vsub.s32 4, %v287
        %v289 = vrot.slane %v279, %v288
        %v290 = vlaneseq
        %v291 = vshrl.u32 %v290, 7
        %v292 = vsub.s32 0, %v291
        %v293 = vrot.slane %v285, %v292
        %v294 = vlaneseq
        %v295 = vshrl.u32 %v294, 7
        %v296 = vsub.s32 0, %v295
        %v297 = vrot.slane %v289, %v296
        %vm298 = vcmp.eq.s32.totalorder %v293, %v281
        %vm299 = vcmp.eq.s32.totalorder %v297, %v281
        %v300 = vsel %vm298, 1, 0
        %v301 = vsel %vm299, 1, 0
        %v302 = vcvt.s32.f32 %v300
        %v303 = vcvt.s32.f32 %v301
        %v304 = vld [vmem:[#allocation2] sm:$0x1]
        %v307 = vcombine.low %v302, %v303
        %v309 = vmul.f32 %v277, %v307
        %v311 = vcombine.high %v309, %v309
        %vm313 = vcmask 1043456
        %v314 = vsel %vm313, %v309, 0.0
        %v315 = vsel %vm313, %v311, 0.0
        %v316 = vadd.f32 %v314, %v315
        %317 = vadd.xlane.f32.xlu0 %v316
        %v318 = vpop.xlane.xlu0 %317
        %v320 = vlaneseq
        %v321 = vshrl.u32 %v320, 7
        %v322 = vsub.s32 0, %v321
        %v323 = vrot.slane %v318, %v322
        %v324 = vlaneseq
        %v325 = vshrl.u32 %v324, 7
        %v326 = vsub.s32 1, %v325
        %v327 = vrot.slane %v318, %v326
        %v328 = vlaneseq
        %v329 = vshrl.u32 %v328, 7
        %v330 = vsub.s32 2, %v329
        %v331 = vrot.slane %v318, %v330
        %v332 = vlaneseq
        %v333 = vshrl.u32 %v332, 7
        %v334 = vsub.s32 3, %v333
        %v335 = vrot.slane %v318, %v334
        %v336 = vcombine.low %v323, %v327
        %v337 = vcombine.low %v331, %v335
        %v339 = vunpack.c.l.s4 1966171168
        %v340 = vunpack.c.0.s8 %v339
        %v341 = vlaneseq
        %v342 = vshrl.u32 %v341, 7
        %v343 = vsub.s32 %v340, %v342
        %v344 = vrot.slane %v336, %v343
        %v346 = vunpack.c.l.s4 1966171168
        %v347 = vunpack.c.0.s8 %v346
        %v348 = vlaneseq
        %v349 = vshrl.u32 %v348, 7
        %v350 = vsub.s32 %v347, %v349
        %v351 = vrot.slane %v337, %v350
        %v352 = vcombine.low %v344, %v351
        %v354 = vunpack.c.l.s4 1966171168
        %v355 = vunpack.c.0.s8 %v354
        %v356 = vlaneseq
        %v357 = vshrl.u32 %v356, 7
        %v358 = vsub.s32 %v355, %v357
        %v359 = vrot.slane %v352, %v358
        %360 = vset.pattern.permute.xlu0 0
        %361 = vperm.xlu0 %360, %v359
        %v362 = vpop.permute.xlu0 %361
        %v363 = vlaneseq
        %v364 = vand.u32 %v363, 127
        %v365 = vlaneseq
        %v366 = vshrl.u32 %v365, 7
        %v367 = vsub.s32 %v364, %v366
        %v368 = vrot.slane %v362, %v367
        %v370 = vunpack.c.l.s4 1966171168
        %v371 = vunpack.c.0.s8 %v370
        %v372 = vlaneseq
        %v373 = vshrl.u32 %v372, 7
        %v374 = vsub.s32 %v371, %v373
        %v375 = vrot.slane %v368, %v374
        %v377 = vunpack.c.l.s4 1966171168
        %v378 = vunpack.c.0.s8 %v377
        %v379 = vlaneseq
        %v380 = vshrl.u32 %v379, 7
        %v381 = vsub.s32 %v378, %v380
        %v382 = vrot.slane %v375, %v381
        %v384 = vadd.f32 %v304, %v382
        %vm385 = vcmask 24576
        %386 = vst.msk [vmem:[#allocation2] sm:$0x1] %vm385, %v384
        %v387 = vld [vmem:[#allocation3] sm:$0x1]
        %v388 = vadd.f32 %v277, %v307
        %v390 = vcombine.high %v388, %v388
        %v392 = vsel %vm313, %v388, 0.0
        %v393 = vsel %vm313, %v390, 0.0
        %v394 = vadd.f32 %v392, %v393
        %395 = vadd.xlane.f32.xlu0 %v394
        %v396 = vpop.xlane.xlu0 %395
        %v398 = vlaneseq
        %v399 = vshrl.u32 %v398, 7
        %v400 = vsub.s32 0, %v399
        %v401 = vrot.slane %v396, %v400
        %v402 = vlaneseq
        %v403 = vshrl.u32 %v402, 7
        %v404 = vsub.s32 1, %v403
        %v405 = vrot.slane %v396, %v404
        %v406 = vlaneseq
        %v407 = vshrl.u32 %v406, 7
        %v408 = vsub.s32 2, %v407
        %v409 = vrot.slane %v396, %v408
        %v410 = vlaneseq
        %v411 = vshrl.u32 %v410, 7
        %v412 = vsub.s32 3, %v411
        %v413 = vrot.slane %v396, %v412
        %v414 = vcombine.low %v401, %v405
        %v415 = vcombine.low %v409, %v413
        %v417 = vunpack.c.l.s4 1966171168
        %v418 = vunpack.c.0.s8 %v417
        %v419 = vlaneseq
        %v420 = vshrl.u32 %v419, 7
        %v421 = vsub.s32 %v418, %v420
        %v422 = vrot.slane %v414, %v421
        %v424 = vunpack.c.l.s4 1966171168
        %v425 = vunpack.c.0.s8 %v424
        %v426 = vlaneseq
        %v427 = vshrl.u32 %v426, 7
        %v428 = vsub.s32 %v425, %v427
        %v429 = vrot.slane %v415, %v428
        %v430 = vcombine.low %v422, %v429
        %v432 = vunpack.c.l.s4 1966171168
        %v433 = vunpack.c.0.s8 %v432
        %v434 = vlaneseq
        %v435 = vshrl.u32 %v434, 7
        %v436 = vsub.s32 %v433, %v435
        %v437 = vrot.slane %v430, %v436
        %438 = vset.pattern.permute.xlu0 0
        %439 = vperm.xlu0 %438, %v437
        %v440 = vpop.permute.xlu0 %439
        %v441 = vlaneseq
        %v442 = vshrl.u32 %v441, 7
        %v443 = vsub.s32 %v364, %v442
        %v444 = vrot.slane %v440, %v443
        %v446 = vunpack.c.l.s4 1966171168
        %v447 = vunpack.c.0.s8 %v446
        %v448 = vlaneseq
        %v449 = vshrl.u32 %v448, 7
        %v450 = vsub.s32 %v447, %v449
        %v451 = vrot.slane %v444, %v450
        %v453 = vunpack.c.l.s4 1966171168
        %v454 = vunpack.c.0.s8 %v453
        %v455 = vlaneseq
        %v456 = vshrl.u32 %v455, 7
        %v457 = vsub.s32 %v454, %v456
        %v458 = vrot.slane %v451, %v457
        %v460 = vadd.f32 %v387, %v458
        %461 = vst.msk [vmem:[#allocation3] sm:$0x1] %vm385, %v460
        // Predicated region
        $region37: #{tpu_custom_call.1} parent=27 // pred_check
          %p462 = pneg %p270
        $region38: #{tpu_custom_call.1} parent=27 // pred_check_branch
          %464 = sbr.rel (%p462) target = $region40
        $region39: #{tpu_custom_call.1} parent=27 // pred_region
          %v465 = vld [vmem:[#allocation2] sm:$0x1]
          %466 = vst.msk [vmem:[%s248] sm:$0x1] %vm385, %v465
          %v467 = vld [vmem:[#allocation3] sm:$0x1]
          %468 = vst.msk [vmem:[%s254] sm:$0x1] %vm385, %v467
        $region40: #{tpu_custom_call.1} parent=27 // pred_fallthru
          _
        %s469 = sand.u32 %s113, 1
        %s470 = scalar_lea.sflag [#allocation6], %s469
        %s471 = sand.u32 %s113, 1
        %s472 = scalar_lea.vmem [#allocation7], %s471
        %s473 = sand.u32 %s141, 1
        %s474 = scalar_lea.sflag [#allocation9], %s473
        %s475 = sand.u32 %s141, 1
        %s476 = scalar_lea.vmem [#allocation8], %s475
        // Predicated region
        $region41: #{tpu_custom_call.1} parent=27 // pred_check
          %p477 = pneg %p123
        $region42: #{tpu_custom_call.1} parent=27 // pred_check_branch
          %479 = sbr.rel (%p477) target = $region44
        $region43: #{tpu_custom_call.1} parent=27 // pred_region
          %s480 = sadd.s32 %s29, %s30
          %s482 = ssub.s32 16, 16
          %483 = vsyncadd %s470, %s482
          %s484 = smul.addr %s480, 16
          %s485 = scalar_lea.hbm %s2, %s484
          %s487 = sshll.u32 %s472, 4
          %s488 = int_to_ptr.vmem [resolvable:$true] %s487
          %490 = dma.vmem_to_hbm [thread:$0]  %s488, 16, %s485, %s470
        $region44: #{tpu_custom_call.1} parent=27 // pred_fallthru
          _
        // Predicated region
        $region45: #{tpu_custom_call.1} parent=27 // pred_check
          %p491 = pneg %p151
        $region46: #{tpu_custom_call.1} parent=27 // pred_check_branch
          %493 = sbr.rel (%p491) target = $region48
        $region47: #{tpu_custom_call.1} parent=27 // pred_region
          %s494 = sadd.s32 %s29, %s30
          %s496 = ssub.s32 16, 16
          %497 = vsyncadd %s474, %s496
          %s498 = smul.addr %s494, 16
          %s499 = scalar_lea.hbm %s3, %s498
          %s501 = sshll.u32 %s476, 4
          %s502 = int_to_ptr.vmem [resolvable:$true] %s501
          %504 = dma.vmem_to_hbm [thread:$0]  %s502, 16, %s499, %s474
        $region48: #{tpu_custom_call.1} parent=27 // pred_fallthru
          _
      $region28: #{tpu_custom_call.1} parent=5 // pred_fallthru
        _
      %p505 = scmp.le.s32.totalorder 2, %s19
      // Predicated region
      $region49: #{tpu_custom_call.1} parent=5 // pred_check
        %p506 = pneg %p505
      $region50: #{tpu_custom_call.1} parent=5 // pred_check_branch
        %508 = sbr.rel (%p506) target = $region52
      $region51: #{tpu_custom_call.1} parent=5 // pred_region
        %s509 = ssub.s32 %s19, 2
        // Predicated region
        $region53: #{tpu_custom_call.1} parent=51 // pred_check
          %p510 = pneg %p129
        $region54: #{tpu_custom_call.1} parent=51 // pred_check_branch
          %512 = sbr.rel (%p510) target = $region56
        $region55: #{tpu_custom_call.1} parent=51 // pred_region
          %s513 = sand.u32 %s114, 1
          %s514 = scalar_lea.sflag [#allocation6], %s513
          %s515 = sand.u32 %s114, 1
          %s516 = scalar_lea.vmem [#allocation7], %s515
          %517 = dma.done %s514, 16
        $region56: #{tpu_custom_call.1} parent=51 // pred_fallthru
          _
        // Predicated region
        $region57: #{tpu_custom_call.1} parent=51 // pred_check
          %p518 = pneg %p157
        $region58: #{tpu_custom_call.1} parent=51 // pred_check_branch
          %520 = sbr.rel (%p518) target = $region60
        $region59: #{tpu_custom_call.1} parent=51 // pred_region
          %s521 = sand.u32 %s142, 1
          %s522 = scalar_lea.sflag [#allocation9], %s521
          %s523 = sand.u32 %s142, 1
          %s524 = scalar_lea.vmem [#allocation8], %s523
          %525 = dma.done %s522, 16
        $region60: #{tpu_custom_call.1} parent=51 // pred_fallthru
          _
      $region52: #{tpu_custom_call.1} parent=5 // pred_fallthru
        _
    $region6: #{tpu_custom_call.1} parent=1 // loop_footer
      %s23 = sadd.s32 1, %s19
    $region7: #{tpu_custom_call.1} parent=1 // loop_footer_branch
      %18 = sbr.rel target = $region3
    $region8: #{tpu_custom_call.1} parent=1 // loop_exit
      _
    %526 = vsyncpa [#allocation5], 1
    %s527 = scalar_lea.sflag [#allocation5], 1
    %528 = vsyncpa %s527, 1
    %529 = vsyncpa [#allocation6], 1
    %s530 = scalar_lea.sflag [#allocation6], 1
    %531 = vsyncpa %s530, 1
    %532 = vsyncpa [#allocation9], 1
    %s533 = scalar_lea.sflag [#allocation9], 1
    %534 = vsyncpa %s533, 1

</llo_original>
